<compile_context>
chip_gen: v5e
topology: v5e:2x2
jax: 0.10.0
libtpu: 0.0.40
codegen_flags: <defaults>
</compile_context>

<pallas_src>
import jax
import jax.numpy as jnp
from jax.experimental import pallas as pl
from jax.experimental.pallas import tpu as pltpu


_LANES = 512          # lane-dense last dim (multiple of 128 -> unmasked stores)
_BLOCK_ROWS = 2048    # 2048 x 512 x 4B = 4 MiB per f32 tile


def _relu_kernel(x_ref, o_ref):
    x = x_ref[...]
    o_ref[...] = jnp.maximum(x, jnp.zeros((), dtype=x.dtype))


def relu_pallas(x: jax.Array, *, block_rows: int = _BLOCK_ROWS,
                lanes: int = _LANES) -> jax.Array:
    """Elementwise ReLU forward (matches torch relu_fwd output) for any shape."""
    orig_shape = x.shape
    dtype = x.dtype
    total = x.size
    if total == 0:
        return x

    # Flatten and pad (< lanes elements) so data is a lane-dense (rows, lanes) slab.
    rows = pl.cdiv(total, lanes)
    padded_total = rows * lanes
    flat = x.reshape(-1)
    if padded_total != total:
        flat = jnp.pad(flat, (0, padded_total - total))
    x2d = flat.reshape(rows, lanes)

    # Big row tiles (multiple of 8 sublanes, or the full array when small).
    br = min(block_rows, rows)
    grid = (pl.cdiv(rows, br),)

    out2d = pl.pallas_call(
        _relu_kernel,
        out_shape=jax.ShapeDtypeStruct((rows, lanes), dtype),
        grid_spec=pltpu.PrefetchScalarGridSpec(
            num_scalar_prefetch=0,
            grid=grid,
            in_specs=[pl.BlockSpec((br, lanes), lambda i: (i, 0))],
            out_specs=pl.BlockSpec((br, lanes), lambda i: (i, 0)),
        ),
        compiler_params=pltpu.CompilerParams(
            dimension_semantics=("parallel",),
            # 2 bufs x (in + out) x 4 MiB ~= 16 MiB; raise above v5e's 16 MiB
            # default scoped VMEM while staying well under v7x's 64 MiB physical.
            vmem_limit_bytes=32 * 1024 * 1024,
        ),
    )(x2d)

    out = out2d.reshape(-1)
    if padded_total != total:
        out = out[:total]
    return out.reshape(orig_shape)


if __name__ == "__main__":
    # Deterministic small example consistent with GAT usage: (nodes, feats).
    key = jax.random.PRNGKey(0)
    N, D = 256, 64
    x = jax.random.normal(key, (N, D), dtype=jnp.float32)

    out = jax.block_until_ready(relu_pallas(x))

    # Reference: plain JAX ReLU (same semantics as fused_gat_cpp.relu_fwd's output).
    ref = jnp.maximum(x, 0.0)
    assert out.shape == x.shape and out.dtype == x.dtype
    assert jnp.array_equal(out, ref)

    print("KERNEL_OK")
</pallas_src>

<mosaic_0001>
module attributes {stable_mosaic.version = 11 : i64} {
  func.func @_relu_kernel(%arg0: i32, %arg1: memref<32x512xf32, #tpu.memory_space<vmem>>, %arg2: memref<32x512xf32, #tpu.memory_space<vmem>>) attributes {dimension_semantics = [#tpu.dimension_semantics<parallel>], iteration_bounds = array<i64: 1>, scalar_prefetch = 0 : i64, scratch_operands = 0 : i64, tpu.core_type = #tpu.core_type<tc>, window_params = [{transform_indices = @transform_0, window_bounds = array<i64: 32, 512>}, {transform_indices = @transform_1, window_bounds = array<i64: 32, 512>}]} {
    %c0 = arith.constant 0 : index
    %c0_0 = arith.constant 0 : index
    %0 = vector.load %arg1[%c0, %c0_0] : memref<32x512xf32, #tpu.memory_space<vmem>>, vector<32x512xf32>
    %cst = arith.constant 0.000000e+00 : f32
    %1 = vector.broadcast %cst : f32 to vector<32x512xf32>
    %2 = arith.maximumf %0, %1 : vector<32x512xf32>
    %c0_1 = arith.constant 0 : index
    %c0_2 = arith.constant 0 : index
    %3 = vector.load %arg2[%c0_1, %c0_2] : memref<32x512xf32, #tpu.memory_space<vmem>>, vector<32x512xf32>
    tpu.vector_store %arg2[%c0_1, %c0_2], %2 {strides = array<i32>} : memref<32x512xf32, #tpu.memory_space<vmem>>, vector<32x512xf32>,
    return
  }
  func.func @transform_0(%arg0: i32) -> (i32, i32) {
    %c0_i32 = arith.constant 0 : i32
    %c0_i32_0 = arith.constant 0 : i32
    return %arg0, %c0_i32 : i32, i32
  }
  func.func @transform_1(%arg0: i32) -> (i32, i32) {
    %c0_i32 = arith.constant 0 : i32
    %c0_i32_0 = arith.constant 0 : i32
    return %arg0, %c0_i32 : i32, i32
  }
}

</mosaic_0001>

<llo_original>
// kernel: tpu_custom_call.1
$region0: #{tpu_custom_call.1}
  #allocation0 [shape = 'u32[]', space=smem, size = 0x4, offset = 0x4, fixed_abs, tag = 'smem constant byte address 0x4 - core index']
  #allocation1 [shape = 'u32[72,128]{1,0:T(1,128)}', space=vmem, size = 0x9000, scoped, tag = 'internal scratch']
  %s0 = inlined_call_operand.hbm [shape: f32[32,512], index: 0, kind: input, shape index: {}]
  %s1 = inlined_call_operand.hbm [shape: f32[32,512], index: 1, kind: output, shape index: {}]
  %s2 = sld [smem:[#allocation0]]
  $region18: #{tpu_custom_call.1} parent=0
    _
  %s4 = ssub.s32 1, %s2
  %s5 = scalar_select 0, %s4, %s2
  $region1: #{tpu_custom_call.1} parent=0
    #allocation2 [shape = 'u8[65536]{0}', space=vmem, size = 0x10000, scoped, tag = 'input window, operand 0, single buffered']
    #allocation3 [shape = 's32[1]{0}', space=sflag, size = 0x4, scoped, tag = 'scoped memory for tpu_custom_call.1']
    #allocation4 [shape = 's32[1]{0}', space=sflag, size = 0x4, scoped, tag = 'scoped memory for tpu_custom_call.1']
    #allocation5 [shape = 'u8[65536]{0}', space=vmem, size = 0x10000, scoped, tag = 'output window, operand 0, single buffered']
    %6 = vsyncpa [#allocation3], 0
    %7 = vsyncpa [#allocation4], 0
    // Predicated region
    $region2: #{tpu_custom_call.1} parent=1 // pred_check
      _
    $region3: #{tpu_custom_call.1} parent=1 // pred_check_branch
      %9 = sbr.rel (0) target = $region5
    $region4: #{tpu_custom_call.1} parent=1 // pred_region
      %11 = vsyncadd [#allocation3], 0
      %s12 = sshll.u32 %s0, 4
      %s13 = int_to_ptr.hbm [resolvable:$true] %s12
      %s14 = sshll.u32 [#allocation2], 4
      %s15 = int_to_ptr.vmem [resolvable:$true] %s14
      %20 = dma.hbm_to_vmem [thread:$0]  %s13, 2048, %s15, [#allocation3], 512, 512, 32
    $region5: #{tpu_custom_call.1} parent=1 // pred_fallthru
      _
    // Predicated region
    $region6: #{tpu_custom_call.1} parent=1 // pred_check
      _
    $region7: #{tpu_custom_call.1} parent=1 // pred_check_branch
      %22 = sbr.rel (0) target = $region9
    $region8: #{tpu_custom_call.1} parent=1 // pred_region
      %24 = dma.done [#allocation3], 2048
    $region9: #{tpu_custom_call.1} parent=1 // pred_fallthru
      _
    %v25 = vld [vmem:[#allocation2] sm:$0xff]
    %v26 = vld [vmem:[#allocation2 + $0x8] sm:$0xff]
    %v27 = vld [vmem:[#allocation2 + $0x10] sm:$0xff]
    %v28 = vld [vmem:[#allocation2 + $0x18] sm:$0xff]
    %v29 = vld [vmem:[#allocation2 + $0x20] sm:$0xff]
    %v30 = vld [vmem:[#allocation2 + $0x28] sm:$0xff]
    %v31 = vld [vmem:[#allocation2 + $0x30] sm:$0xff]
    %v32 = vld [vmem:[#allocation2 + $0x38] sm:$0xff]
    %v33 = vld [vmem:[#allocation2 + $0x40] sm:$0xff]
    %v34 = vld [vmem:[#allocation2 + $0x48] sm:$0xff]
    %v35 = vld [vmem:[#allocation2 + $0x50] sm:$0xff]
    %v36 = vld [vmem:[#allocation2 + $0x58] sm:$0xff]
    %v37 = vld [vmem:[#allocation2 + $0x60] sm:$0xff]
    %v38 = vld [vmem:[#allocation2 + $0x68] sm:$0xff]
    %v39 = vld [vmem:[#allocation2 + $0x70] sm:$0xff]
    %v40 = vld [vmem:[#allocation2 + $0x78] sm:$0xff]
    %v41 = vmax.f32 %v25, 0.0
    %v42 = vmax.f32 %v26, 0.0
    %v43 = vmax.f32 %v27, 0.0
    %v44 = vmax.f32 %v28, 0.0
    %v45 = vmax.f32 %v29, 0.0
    %v46 = vmax.f32 %v30, 0.0
    %v47 = vmax.f32 %v31, 0.0
    %v48 = vmax.f32 %v32, 0.0
    %v49 = vmax.f32 %v33, 0.0
    %v50 = vmax.f32 %v34, 0.0
    %v51 = vmax.f32 %v35, 0.0
    %v52 = vmax.f32 %v36, 0.0
    %v53 = vmax.f32 %v37, 0.0
    %v54 = vmax.f32 %v38, 0.0
    %v55 = vmax.f32 %v39, 0.0
    %v56 = vmax.f32 %v40, 0.0
    %57 = vst [vmem:[#allocation5] sm:$0xff] %v41
    %58 = vst [vmem:[#allocation5 + $0x8] sm:$0xff] %v42
    %59 = vst [vmem:[#allocation5 + $0x10] sm:$0xff] %v43
    %60 = vst [vmem:[#allocation5 + $0x18] sm:$0xff] %v44
    %61 = vst [vmem:[#allocation5 + $0x20] sm:$0xff] %v45
    %62 = vst [vmem:[#allocation5 + $0x28] sm:$0xff] %v46
    %63 = vst [vmem:[#allocation5 + $0x30] sm:$0xff] %v47
    %64 = vst [vmem:[#allocation5 + $0x38] sm:$0xff] %v48
    %65 = vst [vmem:[#allocation5 + $0x40] sm:$0xff] %v49
    %66 = vst [vmem:[#allocation5 + $0x48] sm:$0xff] %v50
    %67 = vst [vmem:[#allocation5 + $0x50] sm:$0xff] %v51
    %68 = vst [vmem:[#allocation5 + $0x58] sm:$0xff] %v52
    %69 = vst [vmem:[#allocation5 + $0x60] sm:$0xff] %v53
    %70 = vst [vmem:[#allocation5 + $0x68] sm:$0xff] %v54
    %71 = vst [vmem:[#allocation5 + $0x70] sm:$0xff] %v55
    %72 = vst [vmem:[#allocation5 + $0x78] sm:$0xff] %v56
    // Predicated region
    $region10: #{tpu_custom_call.1} parent=1 // pred_check
      _
    $region11: #{tpu_custom_call.1} parent=1 // pred_check_branch
      %74 = sbr.rel (0) target = $region13
    $region12: #{tpu_custom_call.1} parent=1 // pred_region
      %76 = vsyncadd [#allocation4], 0
      %s77 = sshll.u32 [#allocation5], 4
      %s78 = int_to_ptr.vmem [resolvable:$true] %s77
      %s79 = sshll.u32 %s1, 4
      %s80 = int_to_ptr.hbm [resolvable:$true] %s79
      %85 = dma.vmem_to_hbm [thread:$0]  %s78, 2048, %s80, [#allocation4], 512, 512, 32
    $region13: #{tpu_custom_call.1} parent=1 // pred_fallthru
      _
    // Predicated region
    $region14: #{tpu_custom_call.1} parent=1 // pred_check
      _
    $region15: #{tpu_custom_call.1} parent=1 // pred_check_branch
      %87 = sbr.rel (0) target = $region17
    $region16: #{tpu_custom_call.1} parent=1 // pred_region
      %89 = dma.done [#allocation4], 2048
    $region17: #{tpu_custom_call.1} parent=1 // pred_fallthru
      _
    %90 = vsyncpa [#allocation3], 1
    %91 = vsyncpa [#allocation4], 1

</llo_original>
